<compile_context>
chip_gen: v6e
topology: v6e:2x2x1
jax: 0.10.0
libtpu: 0.0.40
codegen_flags: <defaults>
</compile_context>

<pallas_src>
import math
import jax
import jax.numpy as jnp
from jax.experimental import pallas as pl
from jax.experimental.pallas import tpu as pltpu

EPS = 1e-5
_MiB = 1024 * 1024


def _ln_linear_kernel(x_ref, w_ref, ln_w_ref, ln_b_ref, lin_b_ref, o_ref, y_ref):
    # x_ref: (tm, K)   w_ref: (K, tn)   ln_w/ln_b: (1, K)   lin_b: (1, tn)
    # o_ref: (tm, tn)  y_ref: (tm, K) scratch in weight dtype (LN cache)

    # Compute LayerNorm only on the first N-tile of each row tile; the inner
    # grid axis is "arbitrary" so the cache survives across j steps.
    @pl.when(pl.program_id(1) == 0)
    def _():
        x = x_ref[...].astype(jnp.float32)
        k_inv = 1.0 / x.shape[-1]
        mean = jnp.sum(x, axis=-1, keepdims=True) * k_inv
        xc = x - mean
        var = jnp.sum(xc * xc, axis=-1, keepdims=True) * k_inv
        rstd = jax.lax.rsqrt(var + EPS)
        ln_w = ln_w_ref[...].astype(jnp.float32)
        ln_b = ln_b_ref[...].astype(jnp.float32)
        y = xc * rstd * ln_w + ln_b
        y_ref[...] = y.astype(y_ref.dtype)

    # MXU matmul: cached normalized activations (already in the weight's
    # native dtype) against the weight tile, f32 accumulation.
    acc = jnp.dot(y_ref[...], w_ref[...], preferred_element_type=jnp.float32)
    acc = acc + lin_b_ref[...].astype(jnp.float32)
    o_ref[...] = acc.astype(o_ref.dtype)


def _round_up(a, b):
    return (a + b - 1) // b * b


def _vmem_capacity_bytes():
    try:
        return int(pltpu.get_tpu_info().vmem_capacity_bytes)
    except Exception:
        return 64 * _MiB  # conservative (v7x-sized) fallback


def _choose_tiles(M, K, N, x_dtype, w_dtype, max_tm, vmem_budget_bytes):
    """Pick (tm, tn) so the working set fits the VMEM budget.

    Prefers a fully resident weight (tn = N) so the weight streams from HBM
    exactly once; otherwise falls back to lane-dense N tiles.
    """
    bx = jnp.dtype(x_dtype).itemsize
    bw = jnp.dtype(w_dtype).itemsize
    bo = bx

    # Native sublane packing: 8 for f32, 16 for bf16, 32 for int8/fp8.
    sublane = max(8, 32 // bx)
    tm = min(max_tm, _round_up(M, sublane))
    tm = max(sublane, _round_up(tm, sublane))

    def est(tm_, tn_):
        return (2 * tm_ * K * bx            # double-buffered X tile
                + 2 * K * tn_ * bw          # double-buffered weight tile
                + 2 * tm_ * tn_ * bo        # double-buffered output tile
                + tm_ * K * bw              # LN cache scratch
                + 2 * (2 * K * 4 + tn_ * 4))  # ln params + bias slice

    # Prefer whole weight resident.
    tn = N
    if est(tm, N) > vmem_budget_bytes:
        for cand in (512, 256, 128):
            if cand <= N and N % cand == 0:
                tn = cand
                break

    # Shrink until the working set fits the budget.
    while est(tm, tn) > vmem_budget_bytes:
        if tn > 128 and tn % 256 == 0:
            tn //= 2
        elif tm > sublane:
            tm = max(sublane, _round_up(tm // 2, sublane))
        else:
            # TODO(synk): add a K-tiled fallback (3rd grid axis + f32
            # accumulator scratch) for very large K on v7x instead of
            # degrading to minimal (sublane, 128) tiles.
            break
    return tm, tn, est(tm, tn)


def layernorm_linear(x, linear_weight, linear_bias, ln_weight, ln_bias, *,
                     max_tm=256, vmem_budget_bytes=None):
    """x: (..., K); linear_weight: (K, N); returns (..., N)."""
    orig_shape = x.shape
    K = orig_shape[-1]
    N = linear_weight.shape[1]
    M = math.prod(orig_shape[:-1])
    x2d = x.reshape(M, K)

    capacity = _vmem_capacity_bytes()
    if vmem_budget_bytes is None:
        # ~100 MiB working-set budget on 128 MiB chips (v5e/v6e), ~40 MiB on
        # 64 MiB v7x (>=16 MiB headroom for Mosaic internal scratch).
        vmem_budget_bytes = max(min(capacity - 24 * _MiB, 100 * _MiB), 24 * _MiB)

    tm, tn, est_bytes = _choose_tiles(M, K, N, x.dtype, linear_weight.dtype,
                                      max_tm, vmem_budget_bytes)

    # Pad rows to a multiple of tm (padded zero rows are normalized harmlessly
    # and sliced away afterwards; no divisibility requirement on M).
    M_pad = _round_up(M, tm)
    if M_pad != M:
        x2d = jnp.pad(x2d, ((0, M_pad - M), (0, 0)))

    ln_w = ln_weight.reshape(1, K)
    ln_b = ln_bias.reshape(1, K)
    lin_b = linear_bias.reshape(1, N)

    grid = (M_pad // tm, N // tn)

    # Scoped VMEM limit tied to the actual working-set estimate plus headroom,
    # capped below physical VMEM (keeps >=16 MiB slack on v7x's 64 MiB).
    vmem_limit = min(int(est_bytes) + 8 * _MiB, capacity - 16 * _MiB)
    vmem_limit = max(vmem_limit, 32 * _MiB)

    out = pl.pallas_call(
        _ln_linear_kernel,
        out_shape=jax.ShapeDtypeStruct((M_pad, N), x.dtype),
        grid_spec=pltpu.PrefetchScalarGridSpec(
            num_scalar_prefetch=0,
            grid=grid,
            in_specs=[
                pl.BlockSpec((tm, K), lambda i, j: (i, 0)),   # X rows (resident across j)
                pl.BlockSpec((K, tn), lambda i, j: (0, j)),   # weight tile (once if tn == N)
                pl.BlockSpec((1, K), lambda i, j: (0, 0)),    # layernorm weight
                pl.BlockSpec((1, K), lambda i, j: (0, 0)),    # layernorm bias
                pl.BlockSpec((1, tn), lambda i, j: (0, j)),   # linear bias slice
            ],
            out_specs=pl.BlockSpec((tm, tn), lambda i, j: (i, j)),
            scratch_shapes=[pltpu.VMEM((tm, K), linear_weight.dtype)],  # LN cache
        ),
        compiler_params=pltpu.CompilerParams(
            # Rows shard across TensorCores; N axis must be "arbitrary" so the
            # per-row-tile LN cache (init under j == 0) stays valid.
            dimension_semantics=("parallel", "arbitrary"),
            vmem_limit_bytes=vmem_limit),
    )(x2d, linear_weight, ln_w, ln_b, lin_b)

    if M_pad != M:
        out = out[:M]
    return out.reshape(orig_shape[:-1] + (N,))


def _init_params(key, K, N, dtype=jnp.float32):
    """Deterministic init matching LayernormLinear.reset_parameters()."""
    k_w, k_b = jax.random.split(key)
    ln_weight = jnp.ones((K,), dtype=dtype)       # WEIGHT = ones(K)
    ln_bias = jnp.zeros((K,), dtype=dtype)        # BIAS = zeros(K)
    # linear_weight: kaiming_uniform_(a=sqrt(5)) on (N, K), then transposed -> (K, N)
    bound_w = 1.0 / math.sqrt(K)
    temp = jax.random.uniform(k_w, (N, K), dtype=jnp.float32,
                              minval=-bound_w, maxval=bound_w)
    linear_weight = temp.T.astype(dtype)          # (K, N)
    # linear_bias: uniform(-1/sqrt(fan_in), 1/sqrt(fan_in)), fan_in = K
    bound_b = 1.0 / math.sqrt(K)
    linear_bias = jax.random.uniform(k_b, (N,), dtype=jnp.float32,
                                     minval=-bound_b, maxval=bound_b).astype(dtype)
    return ln_weight, ln_bias, linear_weight, linear_bias


def _reference(x, linear_weight, linear_bias, ln_weight, ln_bias):
    xf = x.astype(jnp.float32)
    mean = jnp.mean(xf, axis=-1, keepdims=True)
    var = jnp.mean((xf - mean) ** 2, axis=-1, keepdims=True)
    x_hat = (xf - mean) * jax.lax.rsqrt(var + EPS)
    y = x_hat * ln_weight.astype(jnp.float32) + ln_bias.astype(jnp.float32)
    return (y @ linear_weight.astype(jnp.float32)
            + linear_bias.astype(jnp.float32)).astype(x.dtype)


if __name__ == "__main__":
    key = jax.random.PRNGKey(0)
    k_x1, k_x2, k_x3, k_p1, k_p2 = jax.random.split(key, 5)

    # Case 1: small f32, batch=2, seq=8, hidden K=32, output N=32 (M = 16 rows).
    B, S, K, N = 2, 8, 32, 32
    ln_w, ln_b, lin_w, lin_b = _init_params(k_p1, K, N, dtype=jnp.float32)
    x1 = jax.random.normal(k_x1, (B, S, K), dtype=jnp.float32)
    out1 = jax.block_until_ready(layernorm_linear(x1, lin_w, lin_b, ln_w, ln_b))
    ref1 = _reference(x1, lin_w, lin_b, ln_w, ln_b)
    assert out1.shape == (B, S, N), out1.shape
    assert jnp.allclose(out1, ref1, atol=1e-4, rtol=1e-4), "mismatch (case 1)"

    # Case 2: ragged M (exercises the pad-and-slice path).
    x2 = jax.random.normal(k_x2, (1, 5, K), dtype=jnp.float32)
    out2 = jax.block_until_ready(layernorm_linear(x2, lin_w, lin_b, ln_w, ln_b))
    ref2 = _reference(x2, lin_w, lin_b, ln_w, ln_b)
    assert out2.shape == (1, 5, N), out2.shape
    assert jnp.allclose(out2, ref2, atol=1e-4, rtol=1e-4), "mismatch (case 2)"

    # Case 3: bf16 activations + weights (MXU-native dtype path, 16-row sublane).
    K3, N3 = 64, 128
    ln_w3, ln_b3, lin_w3, lin_b3 = _init_params(k_p2, K3, N3, dtype=jnp.bfloat16)
    x3 = jax.random.normal(k_x3, (2, 8, K3), dtype=jnp.bfloat16)
    out3 = jax.block_until_ready(layernorm_linear(x3, lin_w3, lin_b3, ln_w3, ln_b3))
    ref3 = _reference(x3, lin_w3, lin_b3, ln_w3, ln_b3)
    assert out3.shape == (2, 8, N3), out3.shape
    assert jnp.allclose(out3.astype(jnp.float32), ref3.astype(jnp.float32),
                        atol=5e-2, rtol=5e-2), "mismatch (case 3)"

    print("KERNEL_OK")
</pallas_src>

<mosaic_0001>
module attributes {stable_mosaic.version = 11 : i64} {
  func.func @_ln_linear_kernel(%arg0: i32, %arg1: i32, %arg2: memref<16x32xf32, #tpu.memory_space<vmem>>, %arg3: memref<32x32xf32, #tpu.memory_space<vmem>>, %arg4: memref<1x32xf32, #tpu.memory_space<vmem>>, %arg5: memref<1x32xf32, #tpu.memory_space<vmem>>, %arg6: memref<1x32xf32, #tpu.memory_space<vmem>>, %arg7: memref<16x32xf32, #tpu.memory_space<vmem>>, %arg8: memref<16x32xf32, #tpu.memory_space<vmem>>) attributes {dimension_semantics = [#tpu.dimension_semantics<parallel>, #tpu.dimension_semantics<arbitrary>], iteration_bounds = array<i64: 1, 1>, scalar_prefetch = 0 : i64, scratch_operands = 1 : i64, tpu.core_type = #tpu.core_type<tc>, window_params = [{transform_indices = @transform_0, window_bounds = array<i64: 16, 32>}, {transform_indices = @transform_1, window_bounds = array<i64: 32, 32>}, {pipeline_mode = #tpu.pipeline_mode<synchronous>, transform_indices = @transform_2, window_bounds = array<i64: 1, 32>}, {pipeline_mode = #tpu.pipeline_mode<synchronous>, transform_indices = @transform_3, window_bounds = array<i64: 1, 32>}, {transform_indices = @transform_4, window_bounds = array<i64: 1, 32>}, {transform_indices = @transform_5, window_bounds = array<i64: 16, 32>}]} {
    %c0_i32 = arith.constant 0 : i32
    %0 = arith.cmpi eq, %arg1, %c0_i32 : i32
    %1 = arith.extui %0 : i1 to i32
    %c0_i32_0 = arith.constant 0 : i32
    %2 = arith.cmpi ne, %1, %c0_i32_0 : i32
    scf.if %2 {
      %c0_8 = arith.constant 0 : index
      %c0_9 = arith.constant 0 : index
      %10 = vector.load %arg2[%c0_8, %c0_9] : memref<16x32xf32, #tpu.memory_space<vmem>>, vector<16x32xf32>
      %cst_10 = arith.constant dense<0.000000e+00> : vector<16xf32>
      %11 = vector.multi_reduction <add>, %10, %cst_10 [1] : vector<16x32xf32> to vector<16xf32>
      %12 = vector.shape_cast %11 : vector<16xf32> to vector<16x1xf32>
      %cst_11 = arith.constant 3.125000e-02 : f32
      %13 = vector.broadcast %cst_11 : f32 to vector<16x1xf32>
      %14 = arith.mulf %12, %13 : vector<16x1xf32>
      %15 = vector.broadcast %14 : vector<16x1xf32> to vector<16x32xf32>
      %16 = arith.subf %10, %15 : vector<16x32xf32>
      %17 = arith.mulf %16, %16 : vector<16x32xf32>
      %cst_12 = arith.constant dense<0.000000e+00> : vector<16xf32>
      %18 = vector.multi_reduction <add>, %17, %cst_12 [1] : vector<16x32xf32> to vector<16xf32>
      %19 = vector.shape_cast %18 : vector<16xf32> to vector<16x1xf32>
      %cst_13 = arith.constant 3.125000e-02 : f32
      %20 = vector.broadcast %cst_13 : f32 to vector<16x1xf32>
      %21 = arith.mulf %19, %20 : vector<16x1xf32>
      %cst_14 = arith.constant 9.99999974E-6 : f32
      %22 = vector.broadcast %cst_14 : f32 to vector<16x1xf32>
      %23 = arith.addf %21, %22 : vector<16x1xf32>
      %24 = math.rsqrt %23 : vector<16x1xf32>
      %c0_15 = arith.constant 0 : index
      %c0_16 = arith.constant 0 : index
      %25 = vector.load %arg4[%c0_15, %c0_16] : memref<1x32xf32, #tpu.memory_space<vmem>>, vector<1x32xf32>
      %c0_17 = arith.constant 0 : index
      %c0_18 = arith.constant 0 : index
      %26 = vector.load %arg5[%c0_17, %c0_18] : memref<1x32xf32, #tpu.memory_space<vmem>>, vector<1x32xf32>
      %27 = vector.broadcast %24 : vector<16x1xf32> to vector<16x32xf32>
      %28 = arith.mulf %16, %27 : vector<16x32xf32>
      %29 = vector.broadcast %25 : vector<1x32xf32> to vector<16x32xf32>
      %30 = arith.mulf %28, %29 : vector<16x32xf32>
      %31 = vector.broadcast %26 : vector<1x32xf32> to vector<16x32xf32>
      %32 = arith.addf %30, %31 : vector<16x32xf32>
      %c0_19 = arith.constant 0 : index
      %c0_20 = arith.constant 0 : index
      %33 = vector.load %arg8[%c0_19, %c0_20] : memref<16x32xf32, #tpu.memory_space<vmem>>, vector<16x32xf32>
      tpu.vector_store %arg8[%c0_19, %c0_20], %32 {strides = array<i32>} : memref<16x32xf32, #tpu.memory_space<vmem>>, vector<16x32xf32>,
    } else {
    }
    %c0 = arith.constant 0 : index
    %c0_1 = arith.constant 0 : index
    %3 = vector.load %arg8[%c0, %c0_1] : memref<16x32xf32, #tpu.memory_space<vmem>>, vector<16x32xf32>
    %c0_2 = arith.constant 0 : index
    %c0_3 = arith.constant 0 : index
    %4 = vector.load %arg3[%c0_2, %c0_3] : memref<32x32xf32, #tpu.memory_space<vmem>>, vector<32x32xf32>
    %cst = arith.constant dense<0.000000e+00> : vector<16x32xf32>
    %5 = tpu.matmul %3, %4, %cst {dimension_numbers = #tpu.dot_dimension_numbers<[1], [0], [0], [1], [0, 0, 1, 1], [], []>} : vector<16x32xf32>, vector<32x32xf32>, vector<16x32xf32> -> vector<16x32xf32>
    %c0_4 = arith.constant 0 : index
    %c0_5 = arith.constant 0 : index
    %6 = vector.load %arg6[%c0_4, %c0_5] : memref<1x32xf32, #tpu.memory_space<vmem>>, vector<1x32xf32>
    %7 = vector.broadcast %6 : vector<1x32xf32> to vector<16x32xf32>
    %8 = arith.addf %5, %7 : vector<16x32xf32>
    %c0_6 = arith.constant 0 : index
    %c0_7 = arith.constant 0 : index
    %9 = vector.load %arg7[%c0_6, %c0_7] : memref<16x32xf32, #tpu.memory_space<vmem>>, vector<16x32xf32>
    tpu.vector_store %arg7[%c0_6, %c0_7], %8 {strides = array<i32>} : memref<16x32xf32, #tpu.memory_space<vmem>>, vector<16x32xf32>,
    return
  }
  func.func @transform_0(%arg0: i32, %arg1: i32) -> (i32, i32) {
    %c0_i32 = arith.constant 0 : i32
    %c0_i32_0 = arith.constant 0 : i32
    return %arg0, %c0_i32 : i32, i32
  }
  func.func @transform_1(%arg0: i32, %arg1: i32) -> (i32, i32) {
    %c0_i32 = arith.constant 0 : i32
    %c0_i32_0 = arith.constant 0 : i32
    return %c0_i32, %arg1 : i32, i32
  }
  func.func @transform_2(%arg0: i32, %arg1: i32) -> (i32, i32) {
    %c0_i32 = arith.constant 0 : i32
    %c0_i32_0 = arith.constant 0 : i32
    %c0_i32_1 = arith.constant 0 : i32
    return %c0_i32, %c0_i32_0 : i32, i32
  }
  func.func @transform_3(%arg0: i32, %arg1: i32) -> (i32, i32) {
    %c0_i32 = arith.constant 0 : i32
    %c0_i32_0 = arith.constant 0 : i32
    %c0_i32_1 = arith.constant 0 : i32
    return %c0_i32, %c0_i32_0 : i32, i32
  }
  func.func @transform_4(%arg0: i32, %arg1: i32) -> (i32, i32) {
    %c0_i32 = arith.constant 0 : i32
    %c0_i32_0 = arith.constant 0 : i32
    return %c0_i32, %arg1 : i32, i32
  }
  func.func @transform_5(%arg0: i32, %arg1: i32) -> (i32, i32) {
    %c0_i32 = arith.constant 0 : i32
    return %arg0, %arg1 : i32, i32
  }
}

</mosaic_0001>

<llo_original>
// kernel: tpu_custom_call.1
$region0: #{tpu_custom_call.1}
  #allocation0 [shape = 'u32[]', space=smem, size = 0x4, offset = 0x4, fixed_abs, tag = 'smem constant byte address 0x4 - core index']
  #allocation1 [shape = 'u32[144,128]{1,0:T(1,128)}', space=vmem, size = 0x12000, scoped, tag = 'internal scratch']
  #allocation2 [shape = 'f32[16,32]{1,0:T(8,128)}', space=vmem, size = 0x2000, scoped, tag = 'scratch operand']
  %s0 = inlined_call_operand.hbm [shape: f32[16,32], index: 0, kind: input, shape index: {}]
  %s1 = inlined_call_operand.hbm [shape: f32[32,32], index: 1, kind: input, shape index: {}]
  %s2 = inlined_call_operand.vmem [shape: f32[1,32], index: 2, kind: input, shape index: {}]
  %s3 = inlined_call_operand.vmem [shape: f32[1,32], index: 3, kind: input, shape index: {}]
  %s4 = inlined_call_operand.vmem [shape: f32[1,32], index: 4, kind: input, shape index: {}]
  %s5 = inlined_call_operand.hbm [shape: f32[16,32], index: 5, kind: output, shape index: {}]
  %s6 = sld [smem:[#allocation0]]
  $region42: #{tpu_custom_call.1} parent=0
    _
  %s8 = ssub.s32 1, %s6
  %s9 = scalar_select 0, %s8, %s6
  $region1: #{tpu_custom_call.1} parent=0
    #allocation3 [shape = 'u8[8192]{0}', space=vmem, size = 0x2000, scoped, tag = 'input window, operand 0, single buffered']
    #allocation4 [shape = 's32[1]{0}', space=sflag, size = 0x4, scoped, tag = 'scoped memory for tpu_custom_call.1']
    #allocation5 [shape = 's32[1]{0}', space=sflag, size = 0x4, scoped, tag = 'scoped memory for tpu_custom_call.1']
    #allocation6 [shape = 'u8[16384]{0}', space=vmem, size = 0x4000, scoped, tag = 'input window, operand 1, single buffered']
    #allocation7 [shape = 's32[1]{0}', space=sflag, size = 0x4, scoped, tag = 'scoped memory for tpu_custom_call.1']
    #allocation8 [shape = 'u8[8192]{0}', space=vmem, size = 0x2000, scoped, tag = 'output window, operand 0, single buffered']
    %10 = vsyncpa [#allocation4], 0
    %11 = vsyncpa [#allocation7], 0
    %12 = vsyncpa [#allocation5], 0
    // Predicated region
    $region2: #{tpu_custom_call.1} parent=1 // pred_check
      _
    $region3: #{tpu_custom_call.1} parent=1 // pred_check_branch
      %14 = sbr.rel (0) target = $region5
    $region4: #{tpu_custom_call.1} parent=1 // pred_region
      %s16 = ssub.s32 256, 256
      %17 = vsyncadd [#allocation4], %s16
      %s18 = sshll.u32 [#allocation3], 4
      %s19 = int_to_ptr.vmem [resolvable:$true] %s18
      %24 = dma.hbm_to_vmem [thread:$0]  %s0, 256, %s19, [#allocation4], 128, 128, 8
    $region5: #{tpu_custom_call.1} parent=1 // pred_fallthru
      _
    // Predicated region
    $region6: #{tpu_custom_call.1} parent=1 // pred_check
      _
    $region7: #{tpu_custom_call.1} parent=1 // pred_check_branch
      %26 = sbr.rel (0) target = $region9
    $region8: #{tpu_custom_call.1} parent=1 // pred_region
      %s28 = ssub.s32 512, 512
      %29 = vsyncadd [#allocation7], %s28
      %s30 = sshll.u32 [#allocation6], 4
      %s31 = int_to_ptr.vmem [resolvable:$true] %s30
      %36 = dma.hbm_to_vmem [thread:$0]  %s1, 512, %s31, [#allocation7], 128, 128, 8
    $region9: #{tpu_custom_call.1} parent=1 // pred_fallthru
      _
    // Predicated region
    $region10: #{tpu_custom_call.1} parent=1 // pred_check
      _
    $region11: #{tpu_custom_call.1} parent=1 // pred_check_branch
      %38 = sbr.rel (0) target = $region13
    $region12: #{tpu_custom_call.1} parent=1 // pred_region
      _
    $region13: #{tpu_custom_call.1} parent=1 // pred_fallthru
      _
    // Predicated region
    $region14: #{tpu_custom_call.1} parent=1 // pred_check
      _
    $region15: #{tpu_custom_call.1} parent=1 // pred_check_branch
      %40 = sbr.rel (0) target = $region17
    $region16: #{tpu_custom_call.1} parent=1 // pred_region
      _
    $region17: #{tpu_custom_call.1} parent=1 // pred_fallthru
      _
    // Predicated region
    $region18: #{tpu_custom_call.1} parent=1 // pred_check
      _
    $region19: #{tpu_custom_call.1} parent=1 // pred_check_branch
      %42 = sbr.rel (0) target = $region21
    $region20: #{tpu_custom_call.1} parent=1 // pred_region
      _
    $region21: #{tpu_custom_call.1} parent=1 // pred_fallthru
      _
    // Predicated region
    $region22: #{tpu_custom_call.1} parent=1 // pred_check
      _
    $region23: #{tpu_custom_call.1} parent=1 // pred_check_branch
      %44 = sbr.rel (0) target = $region25
    $region24: #{tpu_custom_call.1} parent=1 // pred_region
      %45 = dma.done [#allocation4], 256
    $region25: #{tpu_custom_call.1} parent=1 // pred_fallthru
      _
    // Predicated region
    $region26: #{tpu_custom_call.1} parent=1 // pred_check
      _
    $region27: #{tpu_custom_call.1} parent=1 // pred_check_branch
      %47 = sbr.rel (0) target = $region29
    $region28: #{tpu_custom_call.1} parent=1 // pred_region
      %48 = dma.done [#allocation7], 512
    $region29: #{tpu_custom_call.1} parent=1 // pred_fallthru
      _
    %p49 = scmp.eq.s32.totalorder 0, 0
    // Predicated region
    $region30: #{tpu_custom_call.1} parent=1 // pred_check
      %p50 = pneg %p49
    $region31: #{tpu_custom_call.1} parent=1 // pred_check_branch
      %52 = sbr.rel (%p50) target = $region33
    $region32: #{tpu_custom_call.1} parent=1 // pred_region
      %v53 = vld [vmem:[#allocation3] sm:$0xff]
      %v54 = vld [vmem:[#allocation3 + $0x8] sm:$0xff]
      %vm55 = vcmask 261120
      %v56 = vsel %vm55, %v53, 0.0
      %57 = vadd.xlane.f32.xlu0 %v56
      %v58 = vpop.xlane.xlu0 %57
      %v59 = vsel %vm55, %v54, 0.0
      %60 = vadd.xlane.f32.xlu0 %v59
      %v61 = vpop.xlane.xlu0 %60
      %v62 = vmul.f32 %v58, 0.03125
      %v63 = vmul.f32 %v61, 0.03125
      %v64 = vsub.f32 %v53, %v62
      %v65 = vsub.f32 %v54, %v63
      %v66 = vmul.f32 %v64, %v64
      %v67 = vmul.f32 %v65, %v65
      %v68 = vsel %vm55, %v66, 0.0
      %69 = vadd.xlane.f32.xlu0 %v68
      %v70 = vpop.xlane.xlu0 %69
      %v71 = vsel %vm55, %v67, 0.0
      %72 = vadd.xlane.f32.xlu0 %v71
      %v73 = vpop.xlane.xlu0 %72
      %v74 = vmul.f32 %v70, 0.03125
      %v75 = vmul.f32 %v73, 0.03125
      %v76 = vadd.f32 %v74, 1e-05
      %v77 = vadd.f32 %v75, 1e-05
      %v78 = vrsqrt.pop %v76
      %v79 = vrsqrt.pop %v77
      %v80 = vld [vmem:[%s2] sm:$0x1]
      %v81 = vld [vmem:[%s3] sm:$0x1]
      %v82 = vmul.f32 %v64, %v78
      %v83 = vmul.f32 %v65, %v79
      %v85 = vlaneseq
      %v86 = vshrl.u32 %v85, 7
      %v87 = vsub.s32 0, %v86
      %v88 = vrot.slane %v80, %v87
      %v90 = vmul.f32 %v82, %v88
      %v91 = vmul.f32 %v83, %v88
      %v93 = vlaneseq
      %v94 = vshrl.u32 %v93, 7
      %v95 = vsub.s32 0, %v94
      %v96 = vrot.slane %v81, %v95
      %v98 = vadd.f32 %v90, %v96
      %v99 = vadd.f32 %v91, %v96
      %100 = vst.msk [vmem:[#allocation2] sm:$0xff] %vm55, %v98
      %101 = vst.msk [vmem:[#allocation2 + $0x8] sm:$0xff] %vm55, %v99
    $region33: #{tpu_custom_call.1} parent=1 // pred_fallthru
      _
    %v102 = vld [vmem:[#allocation2] sm:$0xff]
    %v103 = vld [vmem:[#allocation2 + $0x8] sm:$0xff]
    %v104 = vld [vmem:[#allocation6] sm:$0xff]
    %v105 = vld [vmem:[#allocation6 + $0x8] sm:$0xff]
    %v106 = vld [vmem:[#allocation6 + $0x10] sm:$0xff]
    %v107 = vld [vmem:[#allocation6 + $0x18] sm:$0xff]
    %v108 = vld [vmem:[%s4] sm:$0x1]
    %v110 = vlaneseq
    %v111 = vshrl.u32 %v110, 7
    %v112 = vsub.s32 0, %v111
    %v113 = vrot.slane %v108, %v112
    %vm115 = vcmask 261120
    %v117 = vsel %vm115, %v102, 0
    %v120 = vsel %vm115, %v103, 0
    %122 = vmatprep.subr.mxu0 0.0
    %123 = vmatpush1.msra.mxu0 0.0
    %124 = vmatprep.subr.mxu0 0.0
    %125 = vmatpush1.msra.mxu0 0.0
    %126 = vmatprep.subr.mxu0 0.0
    %127 = vmatpush1.msra.mxu0 0.0
    %128 = vmatprep.subr.mxu0 0.0
    %129 = vmatpush1.msra.mxu0 0.0
    %130 = vmatprep.subr.mxu0 0.0
    %131 = vmatpush1.msra.mxu0 0.0
    %132 = vmatprep.subr.mxu0 0.0
    %133 = vmatpush1.msra.mxu0 0.0
    %134 = vmatprep.subr.mxu0 0.0
    %135 = vmatpush1.msra.mxu0 0.0
    %136 = vmatprep.subr.mxu0 0.0
    %137 = vmatpush1.msra.mxu0 0.0
    %138 = vmatprep.subr.mxu0 0.0
    %139 = vmatpush1.msra.mxu0 0.0
    %140 = vmatprep.subr.mxu0 0.0
    %141 = vmatpush1.msra.mxu0 0.0
    %142 = vmatprep.subr.mxu0 0.0
    %143 = vmatpush1.msra.mxu0 0.0
    %144 = vmatprep.subr.mxu0 0.0
    %145 = vmatpush1.msra.mxu0 0.0
    %146 = vmatprep.subr.mxu0 0.0
    %147 = vmatpush1.msra.mxu0 %v107
    %148 = vmatprep.subr.mxu0 0.0
    %149 = vmatpush1.msra.mxu0 %v106
    %150 = vmatprep.subr.mxu0 0.0
    %151 = vmatpush1.msra.mxu0 %v105
    %152 = vmatprep.subr.mxu0 0.0
    %153 = vmatpush1.msra.mxu0 %v104
    %154 = vmatprep.subr.mxu0 0.0
    %155 = vmatpush2.msra.mxu0 0.0
    %156 = vmatprep.subr.mxu0 0.0
    %157 = vmatpush2.msra.mxu0 0.0
    %158 = vmatprep.subr.mxu0 0.0
    %159 = vmatpush2.msra.mxu0 0.0
    %160 = vmatprep.subr.mxu0 0.0
    %161 = vmatpush2.msra.mxu0 0.0
    %162 = vmatprep.subr.mxu0 0.0
    %163 = vmatpush2.msra.mxu0 0.0
    %164 = vmatprep.subr.mxu0 0.0
    %165 = vmatpush2.msra.mxu0 0.0
    %166 = vmatprep.subr.mxu0 0.0
    %167 = vmatpush2.msra.mxu0 0.0
    %168 = vmatprep.subr.mxu0 0.0
    %169 = vmatpush2.msra.mxu0 0.0
    %170 = vmatprep.subr.mxu0 0.0
    %171 = vmatpush2.msra.mxu0 0.0
    %172 = vmatprep.subr.mxu0 0.0
    %173 = vmatpush2.msra.mxu0 0.0
    %174 = vmatprep.subr.mxu0 0.0
    %175 = vmatpush2.msra.mxu0 0.0
    %176 = vmatprep.subr.mxu0 0.0
    %177 = vmatpush2.msra.mxu0 0.0
    %178 = vmatprep.subr.mxu0 0.0
    %179 = vmatpush2.msra.mxu0 0.0
    %180 = vmatprep.subr.mxu0 0.0
    %181 = vmatpush2.msra.mxu0 0.0
    %182 = vmatprep.subr.mxu0 0.0
    %183 = vmatpush2.msra.mxu0 0.0
    %184 = vmatprep.subr.mxu0 0.0
    %185 = vmatpush2.msra.mxu0 0.0
    %186 = vmatprep.mubr.f32.mxu0 0.0
    %187 = vmatmul.mubr.f32.gmra.mxu0 %v117
    %v188 = vpop.f32.mrf.mxu0
    %v189 = vadd.f32 %v113, %v188
    %v190 = vpop.f32.mrf.mxu0
    %191 = vmatprep.mubr.f32.mxu0 0.0
    %192 = vmatmul.mubr.f32.gmra.mxu0 %v120
    %v193 = vpop.f32.mrf.mxu0
    %v194 = vadd.f32 %v113, %v193
    %v195 = vpop.f32.mrf.mxu0
    %196 = vdwg.mxu0
    %197 = vst.msk [vmem:[#allocation8] sm:$0xff] %vm115, %v189
    %198 = vst.msk [vmem:[#allocation8 + $0x8] sm:$0xff] %vm115, %v194
    // Predicated region
    $region34: #{tpu_custom_call.1} parent=1 // pred_check
      _
    $region35: #{tpu_custom_call.1} parent=1 // pred_check_branch
      %200 = sbr.rel (0) target = $region37
    $region36: #{tpu_custom_call.1} parent=1 // pred_region
      %s202 = ssub.s32 256, 256
      %203 = vsyncadd [#allocation5], %s202
      %s204 = sshll.u32 [#allocation8], 4
      %s205 = int_to_ptr.vmem [resolvable:$true] %s204
      %210 = dma.vmem_to_hbm [thread:$0]  %s205, 256, %s5, [#allocation5], 128, 128, 8
    $region37: #{tpu_custom_call.1} parent=1 // pred_fallthru
      _
    // Predicated region
    $region38: #{tpu_custom_call.1} parent=1 // pred_check
      _
    $region39: #{tpu_custom_call.1} parent=1 // pred_check_branch
      %212 = sbr.rel (0) target = $region41
    $region40: #{tpu_custom_call.1} parent=1 // pred_region
      %213 = dma.done [#allocation5], 256
    $region41: #{tpu_custom_call.1} parent=1 // pred_fallthru
      _
    %214 = vsyncpa [#allocation4], 1
    %215 = vsyncpa [#allocation7], 1
    %216 = vsyncpa [#allocation5], 1

</llo_original>
